<compile_context>
chip_gen: v7x
topology: tpu7x:2x2x1
jax: 0.10.0
libtpu: 0.0.40
codegen_flags: <defaults>
</compile_context>

<pallas_src>
import jax
import jax.numpy as jnp
from jax.experimental import pallas as pl
from jax.experimental.pallas import tpu as pltpu

BN_EPS = 1e-5


def _hnn_kernel(x_ref, slab_ref, w1_ref, w2_ref, o_ref):
    """Eb independent BN batches per grid step; whole MLP fused (fits easily in VMEM)."""
    Eb, B, d_in = x_ref.shape
    H = w1_ref.shape[0]
    d_out = o_ref.shape[-1]

    slab = slab_ref[...]                                   # [d_in + 5, H]
    w0 = slab[:d_in, :]                                    # [d_in, H]
    g0 = slab[d_in + 0:d_in + 1, :]                        # [1, H]
    be0 = slab[d_in + 1:d_in + 2, :]
    g1 = slab[d_in + 2:d_in + 3, :]
    be1 = slab[d_in + 3:d_in + 4, :]
    b2 = slab[d_in + 4:d_in + 5, :d_out]                   # [1, d_out] (padded row)

    # Single flattened row-slab for all matmuls: [Eb*B, d].
    x = x_ref[...].astype(jnp.float32).reshape(Eb * B, d_in)

    def bn_sigmoid(h_rows, g, be):
        # Per-ensemble training-mode BatchNorm1d (biased variance over axis=1) + sigmoid.
        h = h_rows.reshape(Eb, B, H)                       # tile-aligned split (B % 8 == 0)
        mu = jnp.mean(h, axis=1, keepdims=True)            # [Eb, 1, H]
        c = h - mu
        var = jnp.mean(c * c, axis=1, keepdims=True)       # biased variance
        scale = g * jax.lax.rsqrt(var + BN_EPS)            # fold gamma into [Eb, 1, H] scale
        return jax.nn.sigmoid(c * scale + be).reshape(Eb * B, H)

    # Hidden block 0: Linear (bias dropped -- cancelled by BN mean subtraction) -> BN -> sigmoid
    h = jnp.dot(x, w0, preferred_element_type=jnp.float32)          # [Eb*B, H]
    h = bn_sigmoid(h, g0, be0)

    # Hidden block 1: Linear (bias dropped) -> BN -> sigmoid
    h = jnp.dot(h, w1_ref[...], preferred_element_type=jnp.float32)
    h = bn_sigmoid(h, g1, be1)

    # Final Linear (keeps its bias, no activation)
    # TODO(synk): make this store lane-dense (last dim >= 128) once Eb*B scales up.
    out = jnp.dot(h, w2_ref[...], preferred_element_type=jnp.float32) + b2
    o_ref[...] = out.reshape(Eb, B, d_out).astype(o_ref.dtype)


def hamiltonian_nn_forward(x, kparams, *, max_rows_per_step=128):
    """kparams = (slab, w1, w2) from pack_params.
    x: [E, B, Din] (E independent BN batches) or [B, Din]."""
    slab, w1, w2 = kparams
    squeeze = x.ndim == 2
    if squeeze:
        x = x[None]
    E, B, d_in = x.shape
    H = w1.shape[0]
    d_out = w2.shape[1]

    # Largest divisor Eb of E with Eb*B <= max_rows_per_step (collapses the grid for small E).
    eb = 1
    for cand in range(1, E + 1):
        if E % cand == 0 and cand * B <= max_rows_per_step:
            eb = cand
    grid_e = E // eb

    out = pl.pallas_call(
        _hnn_kernel,
        grid=(grid_e,),
        in_specs=[
            pl.BlockSpec((eb, B, d_in), lambda e: (e, 0, 0)),    # Eb BN batches per step
            pl.BlockSpec((d_in + 5, H), lambda e: (0, 0)),       # w0 + per-feature params slab
            pl.BlockSpec((H, H), lambda e: (0, 0)),              # weights: grid-resident
            pl.BlockSpec((H, d_out), lambda e: (0, 0)),
        ],
        out_specs=pl.BlockSpec((eb, B, d_out), lambda e: (e, 0, 0)),
        out_shape=jax.ShapeDtypeStruct((E, B, d_out), jnp.float32),
        compiler_params=pltpu.CompilerParams(
            dimension_semantics=("parallel",)),                  # only matters if grid_e > 1
    )(x, slab, w1, w2)
    return out[0] if squeeze else out


def init_params(key, layer_sizes):
    """Deterministic init mimicking nn.Linear defaults (uniform(+-1/sqrt(fan_in)))
    and BatchNorm1d defaults (weight=1, bias=0). Returns the PyTorch-style param tuple
    (w0, b0, g0, be0, w1, b1, g1, be1, w2, b2) with w* pre-transposed to [in, out]."""
    params = []
    for i in range(len(layer_sizes) - 1):
        fan_in, fan_out = layer_sizes[i], layer_sizes[i + 1]
        key, kw, kb = jax.random.split(key, 3)
        bound = 1.0 / jnp.sqrt(fan_in)
        w = jax.random.uniform(kw, (fan_in, fan_out), jnp.float32, -bound, bound)
        b = jax.random.uniform(kb, (1, fan_out), jnp.float32, -bound, bound)
        params.extend([w, b])
        if i < len(layer_sizes) - 2:
            params.extend([jnp.ones((1, fan_out), jnp.float32),
                           jnp.zeros((1, fan_out), jnp.float32)])
    return tuple(params)


def pack_params(torch_like_params):
    """Pack the 10 PyTorch-style params into 3 kernel inputs.
    Drops b0/b1 (exactly cancelled by BN mean subtraction); packs w0 with the
    per-feature vectors into one [d_in+5, H] slab (fewer tiny DMAs)."""
    w0, _b0, g0, be0, w1, _b1, g1, be1, w2, b2 = torch_like_params
    H = w0.shape[1]
    d_out = w2.shape[1]
    assert d_out <= H, "final bias row is padded into the H-wide slab"
    b2_pad = jnp.zeros((1, H), jnp.float32).at[:, :d_out].set(b2)
    slab = jnp.concatenate([w0, g0, be0, g1, be1, b2_pad], axis=0)   # [d_in+5, H]
    return (slab, w1, w2)


def reference_forward(x, torch_like_params):
    """Plain-JAX reference matching the PyTorch module in training mode (biases included)."""
    w0, b0, g0, be0, w1, b1, g1, be1, w2, b2 = torch_like_params

    def block(h, w, b, g, be):
        h = h @ w + b
        mu = jnp.mean(h, axis=0, keepdims=True)
        var = jnp.mean((h - mu) ** 2, axis=0, keepdims=True)
        h = (h - mu) / jnp.sqrt(var + BN_EPS) * g + be
        return jax.nn.sigmoid(h)

    def fwd2d(x2):
        h = block(x2, w0, b0, g0, be0)
        h = block(h, w1, b1, g1, be1)
        return h @ w2 + b2

    if x.ndim == 3:
        return jax.vmap(fwd2d)(x)
    return fwd2d(x)


if __name__ == "__main__":
    # model_specs[0] = layer_sizes: (q, p) phase-space input -> hidden -> hidden -> output
    layer_sizes = [4, 32, 32, 2]
    ensembles, batch = 2, 8    # 2 independent BN batches of 8 phase-space points each

    key = jax.random.PRNGKey(0)
    key, kx = jax.random.split(key)
    x = jax.random.normal(kx, (ensembles, batch, layer_sizes[0]), jnp.float32)

    torch_params = init_params(key, layer_sizes)
    kparams = pack_params(torch_params)

    # Main case: E=2 collapses to a single grid step (Eb=E).
    out = jax.block_until_ready(hamiltonian_nn_forward(x, kparams))
    ref = reference_forward(x, torch_params)
    assert out.shape == (ensembles, batch, layer_sizes[-1])
    assert jnp.allclose(out, ref, atol=1e-5, rtol=1e-5), "mismatch vs reference (3D, E=2)"

    # Larger ensemble count: exercises Eb-blocking (Eb*B = 128 rows/step) with a 2-step grid.
    key, kx2 = jax.random.split(key)
    x_big = jax.random.normal(kx2, (32, batch, layer_sizes[0]), jnp.float32)
    out_big = jax.block_until_ready(hamiltonian_nn_forward(x_big, kparams))
    ref_big = reference_forward(x_big, torch_params)
    assert jnp.allclose(out_big, ref_big, atol=1e-5, rtol=1e-5), "mismatch vs reference (3D, E=32)"

    # 2-D path (single BN batch).
    out2d = jax.block_until_ready(hamiltonian_nn_forward(x[0], kparams))
    ref2d = reference_forward(x[0], torch_params)
    assert jnp.allclose(out2d, ref2d, atol=1e-5, rtol=1e-5), "mismatch vs reference (2D)"

    print("KERNEL_OK")
</pallas_src>

<mosaic_0001>
module attributes {stable_mosaic.version = 11 : i64} {
  func.func @_hnn_kernel(%arg0: i32, %arg1: memref<2x8x4xf32, #tpu.memory_space<vmem>>, %arg2: memref<9x32xf32, #tpu.memory_space<vmem>>, %arg3: memref<32x32xf32, #tpu.memory_space<vmem>>, %arg4: memref<32x2xf32, #tpu.memory_space<vmem>>, %arg5: memref<2x8x2xf32, #tpu.memory_space<vmem>>) attributes {dimension_semantics = [#tpu.dimension_semantics<parallel>], iteration_bounds = array<i64: 1>, scalar_prefetch = 0 : i64, scratch_operands = 0 : i64, tpu.core_type = #tpu.core_type<tc>, window_params = [{transform_indices = @transform_0, window_bounds = array<i64: 2, 8, 4>}, {pipeline_mode = #tpu.pipeline_mode<synchronous>, transform_indices = @transform_1, window_bounds = array<i64: 9, 32>}, {pipeline_mode = #tpu.pipeline_mode<synchronous>, transform_indices = @transform_2, window_bounds = array<i64: 32, 32>}, {pipeline_mode = #tpu.pipeline_mode<synchronous>, transform_indices = @transform_3, window_bounds = array<i64: 32, 2>}, {transform_indices = @transform_4, window_bounds = array<i64: 2, 8, 2>}]} {
    %c0 = arith.constant 0 : index
    %c0_0 = arith.constant 0 : index
    %0 = vector.load %arg2[%c0, %c0_0] : memref<9x32xf32, #tpu.memory_space<vmem>>, vector<9x32xf32>
    %1 = vector.extract_strided_slice %0 {offsets = [0, 0], sizes = [4, 32], strides = [1, 1]} : vector<9x32xf32> to vector<4x32xf32>
    %2 = vector.extract_strided_slice %0 {offsets = [4, 0], sizes = [1, 32], strides = [1, 1]} : vector<9x32xf32> to vector<1x32xf32>
    %3 = vector.extract_strided_slice %0 {offsets = [5, 0], sizes = [1, 32], strides = [1, 1]} : vector<9x32xf32> to vector<1x32xf32>
    %4 = vector.extract_strided_slice %0 {offsets = [6, 0], sizes = [1, 32], strides = [1, 1]} : vector<9x32xf32> to vector<1x32xf32>
    %5 = vector.extract_strided_slice %0 {offsets = [7, 0], sizes = [1, 32], strides = [1, 1]} : vector<9x32xf32> to vector<1x32xf32>
    %6 = vector.extract_strided_slice %0 {offsets = [8, 0], sizes = [1, 2], strides = [1, 1]} : vector<9x32xf32> to vector<1x2xf32>
    %c0_1 = arith.constant 0 : index
    %c0_2 = arith.constant 0 : index
    %c0_3 = arith.constant 0 : index
    %7 = vector.load %arg1[%c0_1, %c0_2, %c0_3] : memref<2x8x4xf32, #tpu.memory_space<vmem>>, vector<2x8x4xf32>
    %8 = vector.shape_cast %7 : vector<2x8x4xf32> to vector<16x4xf32>
    %cst = arith.constant dense<0.000000e+00> : vector<16x32xf32>
    %9 = tpu.matmul %8, %1, %cst {dimension_numbers = #tpu.dot_dimension_numbers<[1], [0], [0], [1], [0, 0, 1, 1], [], []>} : vector<16x4xf32>, vector<4x32xf32>, vector<16x32xf32> -> vector<16x32xf32>
    %10 = vector.shape_cast %9 : vector<16x32xf32> to vector<2x8x32xf32>
    %cst_4 = arith.constant dense<0.000000e+00> : vector<2x32xf32>
    %11 = vector.multi_reduction <add>, %10, %cst_4 [1] : vector<2x8x32xf32> to vector<2x32xf32>
    %12 = vector.shape_cast %11 : vector<2x32xf32> to vector<2x1x32xf32>
    %cst_5 = arith.constant 8.000000e+00 : f32
    %13 = vector.broadcast %cst_5 : f32 to vector<2x1x32xf32>
    %14 = arith.divf %12, %13 : vector<2x1x32xf32>
    %15 = vector.broadcast %14 : vector<2x1x32xf32> to vector<2x8x32xf32>
    %16 = arith.subf %10, %15 : vector<2x8x32xf32>
    %17 = arith.mulf %16, %16 : vector<2x8x32xf32>
    %cst_6 = arith.constant dense<0.000000e+00> : vector<2x32xf32>
    %18 = vector.multi_reduction <add>, %17, %cst_6 [1] : vector<2x8x32xf32> to vector<2x32xf32>
    %19 = vector.shape_cast %18 : vector<2x32xf32> to vector<2x1x32xf32>
    %cst_7 = arith.constant 8.000000e+00 : f32
    %20 = vector.broadcast %cst_7 : f32 to vector<2x1x32xf32>
    %21 = arith.divf %19, %20 : vector<2x1x32xf32>
    %cst_8 = arith.constant 9.99999974E-6 : f32
    %22 = vector.broadcast %cst_8 : f32 to vector<2x1x32xf32>
    %23 = arith.addf %21, %22 : vector<2x1x32xf32>
    %24 = math.rsqrt %23 : vector<2x1x32xf32>
    %25 = vector.shape_cast %2 : vector<1x32xf32> to vector<1x1x32xf32>
    %26 = vector.broadcast %25 : vector<1x1x32xf32> to vector<2x1x32xf32>
    %27 = arith.mulf %26, %24 : vector<2x1x32xf32>
    %28 = vector.broadcast %27 : vector<2x1x32xf32> to vector<2x8x32xf32>
    %29 = arith.mulf %16, %28 : vector<2x8x32xf32>
    %30 = vector.shape_cast %3 : vector<1x32xf32> to vector<1x1x32xf32>
    %31 = vector.broadcast %30 : vector<1x1x32xf32> to vector<2x8x32xf32>
    %32 = arith.addf %29, %31 : vector<2x8x32xf32>
    %33 = arith.negf %32 : vector<2x8x32xf32>
    %34 = math.exp %33 : vector<2x8x32xf32>
    %cst_9 = arith.constant 1.000000e+00 : f32
    %35 = vector.broadcast %cst_9 : f32 to vector<2x8x32xf32>
    %36 = arith.addf %35, %34 : vector<2x8x32xf32>
    %37 = arith.divf %35, %36 : vector<2x8x32xf32>
    %38 = vector.shape_cast %37 : vector<2x8x32xf32> to vector<16x32xf32>
    %c0_10 = arith.constant 0 : index
    %c0_11 = arith.constant 0 : index
    %39 = vector.load %arg3[%c0_10, %c0_11] : memref<32x32xf32, #tpu.memory_space<vmem>>, vector<32x32xf32>
    %cst_12 = arith.constant dense<0.000000e+00> : vector<16x32xf32>
    %40 = tpu.matmul %38, %39, %cst_12 {dimension_numbers = #tpu.dot_dimension_numbers<[1], [0], [0], [1], [0, 0, 1, 1], [], []>} : vector<16x32xf32>, vector<32x32xf32>, vector<16x32xf32> -> vector<16x32xf32>
    %41 = vector.shape_cast %40 : vector<16x32xf32> to vector<2x8x32xf32>
    %cst_13 = arith.constant dense<0.000000e+00> : vector<2x32xf32>
    %42 = vector.multi_reduction <add>, %41, %cst_13 [1] : vector<2x8x32xf32> to vector<2x32xf32>
    %43 = vector.shape_cast %42 : vector<2x32xf32> to vector<2x1x32xf32>
    %cst_14 = arith.constant 8.000000e+00 : f32
    %44 = vector.broadcast %cst_14 : f32 to vector<2x1x32xf32>
    %45 = arith.divf %43, %44 : vector<2x1x32xf32>
    %46 = vector.broadcast %45 : vector<2x1x32xf32> to vector<2x8x32xf32>
    %47 = arith.subf %41, %46 : vector<2x8x32xf32>
    %48 = arith.mulf %47, %47 : vector<2x8x32xf32>
    %cst_15 = arith.constant dense<0.000000e+00> : vector<2x32xf32>
    %49 = vector.multi_reduction <add>, %48, %cst_15 [1] : vector<2x8x32xf32> to vector<2x32xf32>
    %50 = vector.shape_cast %49 : vector<2x32xf32> to vector<2x1x32xf32>
    %cst_16 = arith.constant 8.000000e+00 : f32
    %51 = vector.broadcast %cst_16 : f32 to vector<2x1x32xf32>
    %52 = arith.divf %50, %51 : vector<2x1x32xf32>
    %cst_17 = arith.constant 9.99999974E-6 : f32
    %53 = vector.broadcast %cst_17 : f32 to vector<2x1x32xf32>
    %54 = arith.addf %52, %53 : vector<2x1x32xf32>
    %55 = math.rsqrt %54 : vector<2x1x32xf32>
    %56 = vector.shape_cast %4 : vector<1x32xf32> to vector<1x1x32xf32>
    %57 = vector.broadcast %56 : vector<1x1x32xf32> to vector<2x1x32xf32>
    %58 = arith.mulf %57, %55 : vector<2x1x32xf32>
    %59 = vector.broadcast %58 : vector<2x1x32xf32> to vector<2x8x32xf32>
    %60 = arith.mulf %47, %59 : vector<2x8x32xf32>
    %61 = vector.shape_cast %5 : vector<1x32xf32> to vector<1x1x32xf32>
    %62 = vector.broadcast %61 : vector<1x1x32xf32> to vector<2x8x32xf32>
    %63 = arith.addf %60, %62 : vector<2x8x32xf32>
    %64 = arith.negf %63 : vector<2x8x32xf32>
    %65 = math.exp %64 : vector<2x8x32xf32>
    %cst_18 = arith.constant 1.000000e+00 : f32
    %66 = vector.broadcast %cst_18 : f32 to vector<2x8x32xf32>
    %67 = arith.addf %66, %65 : vector<2x8x32xf32>
    %68 = arith.divf %66, %67 : vector<2x8x32xf32>
    %69 = vector.shape_cast %68 : vector<2x8x32xf32> to vector<16x32xf32>
    %c0_19 = arith.constant 0 : index
    %c0_20 = arith.constant 0 : index
    %70 = vector.load %arg4[%c0_19, %c0_20] : memref<32x2xf32, #tpu.memory_space<vmem>>, vector<32x2xf32>
    %cst_21 = arith.constant dense<0.000000e+00> : vector<16x2xf32>
    %71 = tpu.matmul %69, %70, %cst_21 {dimension_numbers = #tpu.dot_dimension_numbers<[1], [0], [0], [1], [0, 0, 1, 1], [], []>} : vector<16x32xf32>, vector<32x2xf32>, vector<16x2xf32> -> vector<16x2xf32>
    %72 = vector.broadcast %6 : vector<1x2xf32> to vector<16x2xf32>
    %73 = arith.addf %71, %72 : vector<16x2xf32>
    %74 = vector.shape_cast %73 : vector<16x2xf32> to vector<2x8x2xf32>
    %c0_22 = arith.constant 0 : index
    %c0_23 = arith.constant 0 : index
    %c0_24 = arith.constant 0 : index
    %75 = vector.load %arg5[%c0_22, %c0_23, %c0_24] : memref<2x8x2xf32, #tpu.memory_space<vmem>>, vector<2x8x2xf32>
    tpu.vector_store %arg5[%c0_22, %c0_23, %c0_24], %74 {strides = array<i32>} : memref<2x8x2xf32, #tpu.memory_space<vmem>>, vector<2x8x2xf32>,
    return
  }
  func.func @transform_0(%arg0: i32) -> (i32, i32, i32) {
    %c0_i32 = arith.constant 0 : i32
    %c0_i32_0 = arith.constant 0 : i32
    %c0_i32_1 = arith.constant 0 : i32
    return %arg0, %c0_i32, %c0_i32_0 : i32, i32, i32
  }
  func.func @transform_1(%arg0: i32) -> (i32, i32) {
    %c0_i32 = arith.constant 0 : i32
    %c0_i32_0 = arith.constant 0 : i32
    %c0_i32_1 = arith.constant 0 : i32
    return %c0_i32, %c0_i32_0 : i32, i32
  }
  func.func @transform_2(%arg0: i32) -> (i32, i32) {
    %c0_i32 = arith.constant 0 : i32
    %c0_i32_0 = arith.constant 0 : i32
    %c0_i32_1 = arith.constant 0 : i32
    return %c0_i32, %c0_i32_0 : i32, i32
  }
  func.func @transform_3(%arg0: i32) -> (i32, i32) {
    %c0_i32 = arith.constant 0 : i32
    %c0_i32_0 = arith.constant 0 : i32
    %c0_i32_1 = arith.constant 0 : i32
    return %c0_i32, %c0_i32_0 : i32, i32
  }
  func.func @transform_4(%arg0: i32) -> (i32, i32, i32) {
    %c0_i32 = arith.constant 0 : i32
    %c0_i32_0 = arith.constant 0 : i32
    %c0_i32_1 = arith.constant 0 : i32
    return %arg0, %c0_i32, %c0_i32_0 : i32, i32, i32
  }
}

</mosaic_0001>

<llo_original>
// kernel: tpu_custom_call.1
$region0: #{tpu_custom_call.1}
  #allocation0 [shape = 'u32[]', space=smem, size = 0x4, offset = 0x4, fixed_abs, tag = 'smem constant byte address 0x4 - core index']
  #allocation1 [shape = 'u32[144,128]{1,0:T(1,128)}', space=vmem, size = 0x12000, scoped, tag = 'internal scratch']
  %s0 = inlined_call_operand.vmem [shape: f32[2,8,4], index: 0, kind: input, shape index: {}]
  %s1 = inlined_call_operand.vmem [shape: f32[9,32], index: 1, kind: input, shape index: {}]
  %s2 = inlined_call_operand.vmem [shape: f32[32,32], index: 2, kind: input, shape index: {}]
  %s3 = inlined_call_operand.vmem [shape: f32[32,2], index: 3, kind: input, shape index: {}]
  %s4 = inlined_call_operand.vmem [shape: f32[2,8,2], index: 4, kind: output, shape index: {}]
  %s5 = sld [smem:[#allocation0]]
  $region26: #{tpu_custom_call.1} parent=0
    _
  %s7 = ssub.s32 1, %s5
  %s8 = scalar_select 0, %s7, %s5
  // Predicated region
  $region2: #{tpu_custom_call.1} parent=0 // pred_check
    _
  $region3: #{tpu_custom_call.1} parent=0 // pred_check_branch
    %10 = sbr.rel (0) target = $region5
  $region4: #{tpu_custom_call.1} parent=0 // pred_region
    _
  $region5: #{tpu_custom_call.1} parent=0 // pred_fallthru
    _
  // Predicated region
  $region6: #{tpu_custom_call.1} parent=0 // pred_check
    _
  $region7: #{tpu_custom_call.1} parent=0 // pred_check_branch
    %12 = sbr.rel (0) target = $region9
  $region8: #{tpu_custom_call.1} parent=0 // pred_region
    _
  $region9: #{tpu_custom_call.1} parent=0 // pred_fallthru
    _
  // Predicated region
  $region10: #{tpu_custom_call.1} parent=0 // pred_check
    _
  $region11: #{tpu_custom_call.1} parent=0 // pred_check_branch
    %14 = sbr.rel (0) target = $region13
  $region12: #{tpu_custom_call.1} parent=0 // pred_region
    _
  $region13: #{tpu_custom_call.1} parent=0 // pred_fallthru
    _
  // Predicated region
  $region14: #{tpu_custom_call.1} parent=0 // pred_check
    _
  $region15: #{tpu_custom_call.1} parent=0 // pred_check_branch
    %16 = sbr.rel (0) target = $region17
  $region16: #{tpu_custom_call.1} parent=0 // pred_region
    _
  $region17: #{tpu_custom_call.1} parent=0 // pred_fallthru
    _
  %v17 = vld [vmem:[%s1] sm:$0xff]
  %v18 = vld [vmem:[%s1 + $0x8] sm:$0x1]
  %v19 = vld [vmem:[%s0] sm:$0xff]
  %v20 = vld [vmem:[%s0 + $0x8] sm:$0xff]
  %vm21 = vcmask 31744
  %v23 = vsel %vm21, %v19, 0
  %v26 = vsel %vm21, %v20, 0
  %vm28 = vcmask 1043456
  %v30 = vsel %vm28, %v17, 0
  %32 = vmatprep.subr.mxu0 0.0
  %33 = vmatpush1.msra.mxu0 %v30
  %34 = vmatprep.subr.mxu0 0.0
  %35 = vmatpush1.msra.mxu0 0.0
  %36 = vmatprep.subr.mxu0 0.0
  %37 = vmatpush1.msra.mxu0 0.0
  %38 = vmatprep.subr.mxu0 0.0
  %39 = vmatpush1.msra.mxu0 0.0
  %40 = vmatprep.subr.mxu0 0.0
  %41 = vmatpush1.msra.mxu0 0.0
  %42 = vmatprep.subr.mxu0 0.0
  %43 = vmatpush1.msra.mxu0 0.0
  %44 = vmatprep.subr.mxu0 0.0
  %45 = vmatpush1.msra.mxu0 0.0
  %46 = vmatprep.subr.mxu0 0.0
  %47 = vmatpush1.msra.mxu0 0.0
  %48 = vmatprep.subr.mxu0 0.0
  %49 = vmatpush1.msra.mxu0 0.0
  %50 = vmatprep.subr.mxu0 0.0
  %51 = vmatpush1.msra.mxu0 0.0
  %52 = vmatprep.subr.mxu0 0.0
  %53 = vmatpush1.msra.mxu0 0.0
  %54 = vmatprep.subr.mxu0 0.0
  %55 = vmatpush1.msra.mxu0 0.0
  %56 = vmatprep.subr.mxu0 0.0
  %57 = vmatpush1.msra.mxu0 0.0
  %58 = vmatprep.subr.mxu0 0.0
  %59 = vmatpush1.msra.mxu0 0.0
  %60 = vmatprep.subr.mxu0 0.0
  %61 = vmatpush1.msra.mxu0 0.0
  %62 = vmatprep.subr.mxu0 0.0
  %63 = vmatpush1.msra.mxu0 0.0
  %64 = vmatprep.subr.mxu0 0.0
  %65 = vmatpush1.msra.mxu0 0.0
  %66 = vmatprep.subr.mxu0 0.0
  %67 = vmatpush1.msra.mxu0 0.0
  %68 = vmatprep.subr.mxu0 0.0
  %69 = vmatpush1.msra.mxu0 0.0
  %70 = vmatprep.subr.mxu0 0.0
  %71 = vmatpush1.msra.mxu0 0.0
  %72 = vmatprep.subr.mxu0 0.0
  %73 = vmatpush1.msra.mxu0 0.0
  %74 = vmatprep.subr.mxu0 0.0
  %75 = vmatpush1.msra.mxu0 0.0
  %76 = vmatprep.subr.mxu0 0.0
  %77 = vmatpush1.msra.mxu0 0.0
  %78 = vmatprep.subr.mxu0 0.0
  %79 = vmatpush1.msra.mxu0 0.0
  %80 = vmatprep.subr.mxu0 0.0
  %81 = vmatpush1.msra.mxu0 0.0
  %82 = vmatprep.subr.mxu0 0.0
  %83 = vmatpush1.msra.mxu0 0.0
  %84 = vmatprep.subr.mxu0 0.0
  %85 = vmatpush1.msra.mxu0 0.0
  %86 = vmatprep.subr.mxu0 0.0
  %87 = vmatpush1.msra.mxu0 0.0
  %88 = vmatprep.subr.mxu0 0.0
  %89 = vmatpush1.msra.mxu0 0.0
  %90 = vmatprep.subr.mxu0 0.0
  %91 = vmatpush1.msra.mxu0 0.0
  %92 = vmatprep.subr.mxu0 0.0
  %93 = vmatpush1.msra.mxu0 0.0
  %94 = vmatprep.subr.mxu0 0.0
  %95 = vmatpush1.msra.mxu0 0.0
  %96 = vmatprep.mubr.f32.mxu0 0.0
  %97 = vmatmul.mubr.f32.gmra.mrb[0].mxu0 %v23
  %v98 = vpop.f32.mrb[0].mxu0
  %v99 = vadd.f32 0.0, %v98
  %v100 = vpop.f32.mrb[0].mxu0
  %101 = vmatprep.mubr.f32.mxu0 0.0
  %102 = vmatmul.mubr.f32.gmra.mrb[0].mxu0 %v26
  %v103 = vpop.f32.mrb[0].mxu0
  %v104 = vadd.f32 0.0, %v103
  %v105 = vpop.f32.mrb[0].mxu0
  %106 = vdwg.mxu0
  %vm107 = vcmask 261120
  %v108 = vsel %vm107, %v99, 0.0
  %v109 = vrot.slane %v108, 4
  %v110 = vadd.f32 %v108, %v109
  %v111 = vrot.slane %v110, 2
  %v112 = vadd.f32 %v110, %v111
  %v113 = vrot.slane %v112, 1
  %v114 = vadd.f32 %v112, %v113
  %v115 = vsel %vm107, %v104, 0.0
  %v116 = vrot.slane %v115, 4
  %v117 = vadd.f32 %v115, %v116
  %v118 = vrot.slane %v117, 2
  %v119 = vadd.f32 %v117, %v118
  %v120 = vrot.slane %v119, 1
  %v121 = vadd.f32 %v119, %v120
  %v122 = vrcp.pop 8.0
  %v123 = vmul.f32 %v114, %v122
  %v124 = vmul.f32 %v121, %v122
  %v125 = vsub.f32 %v99, %v123
  %v126 = vsub.f32 %v104, %v124
  %v127 = vmul.f32 %v125, %v125
  %v128 = vmul.f32 %v126, %v126
  %v129 = vsel %vm107, %v127, 0.0
  %v130 = vrot.slane %v129, 4
  %v131 = vadd.f32 %v129, %v130
  %v132 = vrot.slane %v131, 2
  %v133 = vadd.f32 %v131, %v132
  %v134 = vrot.slane %v133, 1
  %v135 = vadd.f32 %v133, %v134
  %v136 = vsel %vm107, %v128, 0.0
  %v137 = vrot.slane %v136, 4
  %v138 = vadd.f32 %v136, %v137
  %v139 = vrot.slane %v138, 2
  %v140 = vadd.f32 %v138, %v139
  %v141 = vrot.slane %v140, 1
  %v142 = vadd.f32 %v140, %v141
  %v143 = vmul.f32 %v135, %v122
  %v144 = vmul.f32 %v142, %v122
  %v145 = vadd.f32 %v143, 1e-05
  %v146 = vadd.f32 %v144, 1e-05
  %v147 = vrsqrt.pop %v145
  %v148 = vrsqrt.pop %v146
  %v149 = vmul.f32 %v17, %v147
  %v150 = vmul.f32 %v17, %v148
  %v151 = vlaneseq
  %v152 = vshrl.u32 %v151, 7
  %v153 = vsub.s32 4, %v152
  %v154 = vrot.slane %v149, %v153
  %v155 = vlaneseq
  %v156 = vshrl.u32 %v155, 7
  %v157 = vsub.s32 4, %v156
  %v158 = vrot.slane %v150, %v157
  %v159 = vmul.f32 %v125, %v154
  %v160 = vmul.f32 %v126, %v158
  %v161 = vlaneseq
  %v162 = vshrl.u32 %v161, 7
  %v163 = vsub.s32 5, %v162
  %v164 = vrot.slane %v17, %v163
  %v165 = vadd.f32 %v159, %v164
  %v166 = vadd.f32 %v160, %v164
  %v167 = vxor.u32 %v165, 2147483648
  %v168 = vxor.u32 %v166, 2147483648
  %v169 = vmul.f32 %v167, 1.442695
  %v170 = vpow.pop %v169
  %v171 = vmul.f32 %v168, 1.442695
  %v172 = vpow.pop %v171
  %v173 = vadd.f32 %v170, 1.0
  %v174 = vadd.f32 %v172, 1.0
  %v175 = vrcp.pop %v173
  %v176 = vmul.f32 1.0, %v175
  %v177 = vrcp.pop %v174
  %v178 = vmul.f32 1.0, %v177
  %v179 = vld [vmem:[%s2] sm:$0xff]
  %v180 = vld [vmem:[%s2 + $0x8] sm:$0xff]
  %v181 = vld [vmem:[%s2 + $0x10] sm:$0xff]
  %v182 = vld [vmem:[%s2 + $0x18] sm:$0xff]
  %v184 = vsel %vm107, %v176, 0
  %v187 = vsel %vm107, %v178, 0
  %189 = vmatprep.subr.mxu0 0.0
  %190 = vmatpush1.msra.mxu0 %v179
  %191 = vmatprep.subr.mxu0 0.0
  %192 = vmatpush1.msra.mxu0 %v180
  %193 = vmatprep.subr.mxu0 0.0
  %194 = vmatpush1.msra.mxu0 %v181
  %195 = vmatprep.subr.mxu0 0.0
  %196 = vmatpush1.msra.mxu0 %v182
  %197 = vmatprep.subr.mxu0 0.0
  %198 = vmatpush1.msra.mxu0 0.0
  %199 = vmatprep.subr.mxu0 0.0
  %200 = vmatpush1.msra.mxu0 0.0
  %201 = vmatprep.subr.mxu0 0.0
  %202 = vmatpush1.msra.mxu0 0.0
  %203 = vmatprep.subr.mxu0 0.0
  %204 = vmatpush1.msra.mxu0 0.0
  %205 = vmatprep.subr.mxu0 0.0
  %206 = vmatpush1.msra.mxu0 0.0
  %207 = vmatprep.subr.mxu0 0.0
  %208 = vmatpush1.msra.mxu0 0.0
  %209 = vmatprep.subr.mxu0 0.0
  %210 = vmatpush1.msra.mxu0 0.0
  %211 = vmatprep.subr.mxu0 0.0
  %212 = vmatpush1.msra.mxu0 0.0
  %213 = vmatprep.subr.mxu0 0.0
  %214 = vmatpush1.msra.mxu0 0.0
  %215 = vmatprep.subr.mxu0 0.0
  %216 = vmatpush1.msra.mxu0 0.0
  %217 = vmatprep.subr.mxu0 0.0
  %218 = vmatpush1.msra.mxu0 0.0
  %219 = vmatprep.subr.mxu0 0.0
  %220 = vmatpush1.msra.mxu0 0.0
  %221 = vmatprep.subr.mxu0 0.0
  %222 = vmatpush1.msra.mxu0 0.0
  %223 = vmatprep.subr.mxu0 0.0
  %224 = vmatpush1.msra.mxu0 0.0
  %225 = vmatprep.subr.mxu0 0.0
  %226 = vmatpush1.msra.mxu0 0.0
  %227 = vmatprep.subr.mxu0 0.0
  %228 = vmatpush1.msra.mxu0 0.0
  %229 = vmatprep.subr.mxu0 0.0
  %230 = vmatpush1.msra.mxu0 0.0
  %231 = vmatprep.subr.mxu0 0.0
  %232 = vmatpush1.msra.mxu0 0.0
  %233 = vmatprep.subr.mxu0 0.0
  %234 = vmatpush1.msra.mxu0 0.0
  %235 = vmatprep.subr.mxu0 0.0
  %236 = vmatpush1.msra.mxu0 0.0
  %237 = vmatprep.subr.mxu0 0.0
  %238 = vmatpush1.msra.mxu0 0.0
  %239 = vmatprep.subr.mxu0 0.0
  %240 = vmatpush1.msra.mxu0 0.0
  %241 = vmatprep.subr.mxu0 0.0
  %242 = vmatpush1.msra.mxu0 0.0
  %243 = vmatprep.subr.mxu0 0.0
  %244 = vmatpush1.msra.mxu0 0.0
  %245 = vmatprep.subr.mxu0 0.0
  %246 = vmatpush1.msra.mxu0 0.0
  %247 = vmatprep.subr.mxu0 0.0
  %248 = vmatpush1.msra.mxu0 0.0
  %249 = vmatprep.subr.mxu0 0.0
  %250 = vmatpush1.msra.mxu0 0.0
  %251 = vmatprep.subr.mxu0 0.0
  %252 = vmatpush1.msra.mxu0 0.0
  %253 = vmatprep.mubr.f32.mxu0 0.0
  %254 = vmatmul.mubr.f32.gmra.mrb[0].mxu0 %v184
  %v255 = vpop.f32.mrb[0].mxu0
  %v256 = vadd.f32 0.0, %v255
  %v257 = vpop.f32.mrb[0].mxu0
  %258 = vmatprep.mubr.f32.mxu0 0.0
  %259 = vmatmul.mubr.f32.gmra.mrb[0].mxu0 %v187
  %v260 = vpop.f32.mrb[0].mxu0
  %v261 = vadd.f32 0.0, %v260
  %v262 = vpop.f32.mrb[0].mxu0
  %263 = vdwg.mxu0
  %v264 = vsel %vm107, %v256, 0.0
  %v265 = vrot.slane %v264, 4
  %v266 = vadd.f32 %v264, %v265
  %v267 = vrot.slane %v266, 2
  %v268 = vadd.f32 %v266, %v267
  %v269 = vrot.slane %v268, 1
  %v270 = vadd.f32 %v268, %v269
  %v271 = vsel %vm107, %v261, 0.0
  %v272 = vrot.slane %v271, 4
  %v273 = vadd.f32 %v271, %v272
  %v274 = vrot.slane %v273, 2
  %v275 = vadd.f32 %v273, %v274
  %v276 = vrot.slane %v275, 1
  %v277 = vadd.f32 %v275, %v276
  %v278 = vmul.f32 %v270, %v122
  %v279 = vmul.f32 %v277, %v122
  %v280 = vsub.f32 %v256, %v278
  %v281 = vsub.f32 %v261, %v279
  %v282 = vmul.f32 %v280, %v280
  %v283 = vmul.f32 %v281, %v281
  %v284 = vsel %vm107, %v282, 0.0
  %v285 = vrot.slane %v284, 4
  %v286 = vadd.f32 %v284, %v285
  %v287 = vrot.slane %v286, 2
  %v288 = vadd.f32 %v286, %v287
  %v289 = vrot.slane %v288, 1
  %v290 = vadd.f32 %v288, %v289
  %v291 = vsel %vm107, %v283, 0.0
  %v292 = vrot.slane %v291, 4
  %v293 = vadd.f32 %v291, %v292
  %v294 = vrot.slane %v293, 2
  %v295 = vadd.f32 %v293, %v294
  %v296 = vrot.slane %v295, 1
  %v297 = vadd.f32 %v295, %v296
  %v298 = vmul.f32 %v290, %v122
  %v299 = vmul.f32 %v297, %v122
  %v300 = vadd.f32 %v298, 1e-05
  %v301 = vadd.f32 %v299, 1e-05
  %v302 = vrsqrt.pop %v300
  %v303 = vrsqrt.pop %v301
  %v304 = vmul.f32 %v17, %v302
  %v305 = vmul.f32 %v17, %v303
  %v306 = vlaneseq
  %v307 = vshrl.u32 %v306, 7
  %v308 = vsub.s32 6, %v307
  %v309 = vrot.slane %v304, %v308
  %v310 = vlaneseq
  %v311 = vshrl.u32 %v310, 7
  %v312 = vsub.s32 6, %v311
  %v313 = vrot.slane %v305, %v312
  %v314 = vmul.f32 %v280, %v309
  %v315 = vmul.f32 %v281, %v313
  %v316 = vlaneseq
  %v317 = vshrl.u32 %v316, 7
  %v318 = vsub.s32 7, %v317
  %v319 = vrot.slane %v17, %v318
  %v320 = vadd.f32 %v314, %v319
  %v321 = vadd.f32 %v315, %v319
  %v322 = vxor.u32 %v320, 2147483648
  %v323 = vxor.u32 %v321, 2147483648
  %v324 = vmul.f32 %v322, 1.442695
  %v325 = vpow.pop %v324
  %v326 = vmul.f32 %v323, 1.442695
  %v327 = vpow.pop %v326
  %v328 = vadd.f32 %v325, 1.0
  %v329 = vadd.f32 %v327, 1.0
  %v330 = vrcp.pop %v328
  %v331 = vmul.f32 1.0, %v330
  %v332 = vrcp.pop %v329
  %v333 = vmul.f32 1.0, %v332
  %v334 = vld [vmem:[%s3] sm:$0xff]
  %v335 = vld [vmem:[%s3 + $0x8] sm:$0xff]
  %v336 = vld [vmem:[%s3 + $0x10] sm:$0xff]
  %v337 = vld [vmem:[%s3 + $0x18] sm:$0xff]
  %v338 = vlaneseq
  %v339 = vshrl.u32 %v338, 7
  %v340 = vsub.s32 0, %v339
  %v341 = vrot.slane %v18, %v340
  %v343 = vsel %vm107, %v331, 0
  %v346 = vsel %vm107, %v333, 0
  %348 = vmatprep.subr.mxu0 0.0
  %349 = vmatpush1.msra.mxu0 %v334
  %350 = vmatprep.subr.mxu0 0.0
  %351 = vmatpush1.msra.mxu0 %v335
  %352 = vmatprep.subr.mxu0 0.0
  %353 = vmatpush1.msra.mxu0 %v336
  %354 = vmatprep.subr.mxu0 0.0
  %355 = vmatpush1.msra.mxu0 %v337
  %356 = vmatprep.subr.mxu0 0.0
  %357 = vmatpush1.msra.mxu0 0.0
  %358 = vmatprep.subr.mxu0 0.0
  %359 = vmatpush1.msra.mxu0 0.0
  %360 = vmatprep.subr.mxu0 0.0
  %361 = vmatpush1.msra.mxu0 0.0
  %362 = vmatprep.subr.mxu0 0.0
  %363 = vmatpush1.msra.mxu0 0.0
  %364 = vmatprep.subr.mxu0 0.0
  %365 = vmatpush1.msra.mxu0 0.0
  %366 = vmatprep.subr.mxu0 0.0
  %367 = vmatpush1.msra.mxu0 0.0
  %368 = vmatprep.subr.mxu0 0.0
  %369 = vmatpush1.msra.mxu0 0.0
  %370 = vmatprep.subr.mxu0 0.0
  %371 = vmatpush1.msra.mxu0 0.0
  %372 = vmatprep.subr.mxu0 0.0
  %373 = vmatpush1.msra.mxu0 0.0
  %374 = vmatprep.subr.mxu0 0.0
  %375 = vmatpush1.msra.mxu0 0.0
  %376 = vmatprep.subr.mxu0 0.0
  %377 = vmatpush1.msra.mxu0 0.0
  %378 = vmatprep.subr.mxu0 0.0
  %379 = vmatpush1.msra.mxu0 0.0
  %380 = vmatprep.subr.mxu0 0.0
  %381 = vmatpush1.msra.mxu0 0.0
  %382 = vmatprep.subr.mxu0 0.0
  %383 = vmatpush1.msra.mxu0 0.0
  %384 = vmatprep.subr.mxu0 0.0
  %385 = vmatpush1.msra.mxu0 0.0
  %386 = vmatprep.subr.mxu0 0.0
  %387 = vmatpush1.msra.mxu0 0.0
  %388 = vmatprep.subr.mxu0 0.0
  %389 = vmatpush1.msra.mxu0 0.0
  %390 = vmatprep.subr.mxu0 0.0
  %391 = vmatpush1.msra.mxu0 0.0
  %392 = vmatprep.subr.mxu0 0.0
  %393 = vmatpush1.msra.mxu0 0.0
  %394 = vmatprep.subr.mxu0 0.0
  %395 = vmatpush1.msra.mxu0 0.0
  %396 = vmatprep.subr.mxu0 0.0
  %397 = vmatpush1.msra.mxu0 0.0
  %398 = vmatprep.subr.mxu0 0.0
  %399 = vmatpush1.msra.mxu0 0.0
  %400 = vmatprep.subr.mxu0 0.0
  %401 = vmatpush1.msra.mxu0 0.0
  %402 = vmatprep.subr.mxu0 0.0
  %403 = vmatpush1.msra.mxu0 0.0
  %404 = vmatprep.subr.mxu0 0.0
  %405 = vmatpush1.msra.mxu0 0.0
  %406 = vmatprep.subr.mxu0 0.0
  %407 = vmatpush1.msra.mxu0 0.0
  %408 = vmatprep.subr.mxu0 0.0
  %409 = vmatpush1.msra.mxu0 0.0
  %410 = vmatprep.subr.mxu0 0.0
  %411 = vmatpush1.msra.mxu0 0.0
  %412 = vmatprep.mubr.f32.mxu0 0.0
  %413 = vmatmul.mubr.f32.gmra.mrb[0].mxu0 %v343
  %v414 = vpop.f32.mrb[0].mxu0
  %v415 = vadd.f32 %v341, %v414
  %v416 = vpop.f32.mrb[0].mxu0
  %417 = vmatprep.mubr.f32.mxu0 0.0
  %418 = vmatmul.mubr.f32.gmra.mrb[0].mxu0 %v346
  %v419 = vpop.f32.mrb[0].mxu0
  %v420 = vadd.f32 %v341, %v419
  %v421 = vpop.f32.mrb[0].mxu0
  %422 = vdwg.mxu0
  %vm423 = vcmask 15360
  %424 = vst.msk [vmem:[%s4] sm:$0xff] %vm423, %v415
  %425 = vst.msk [vmem:[%s4 + $0x8] sm:$0xff] %vm423, %v420
  // Predicated region
  $region18: #{tpu_custom_call.1} parent=0 // pred_check
    _
  $region19: #{tpu_custom_call.1} parent=0 // pred_check_branch
    %427 = sbr.rel (0) target = $region21
  $region20: #{tpu_custom_call.1} parent=0 // pred_region
    _
  $region21: #{tpu_custom_call.1} parent=0 // pred_fallthru
    _
  // Predicated region
  $region22: #{tpu_custom_call.1} parent=0 // pred_check
    _
  $region23: #{tpu_custom_call.1} parent=0 // pred_check_branch
    %429 = sbr.rel (0) target = $region25
  $region24: #{tpu_custom_call.1} parent=0 // pred_region
    _
  $region25: #{tpu_custom_call.1} parent=0 // pred_fallthru
    _

</llo_original>
